<compile_context>
chip_gen: v7x
topology: tpu7x:2x2x1
jax: 0.10.0
libtpu: 0.0.40
codegen_flags: <defaults>
</compile_context>

<pallas_src>
import jax
import jax.numpy as jnp
from jax.experimental import pallas as pl
from jax.experimental.pallas import tpu as pltpu


def _static_roll(v, shift, axis, size):
    """torch.roll / jnp.roll semantics for a static (Python int) shift."""
    s = shift % size
    if s == 0:
        return v
    lo = jax.lax.slice_in_dim(v, size - s, size, axis=axis)   # wraps to the front
    hi = jax.lax.slice_in_dim(v, 0, size - s, axis=axis)
    return jnp.concatenate([lo, hi], axis=axis)


def cyclic_shift(x, displacement):
    """torch.roll(x, shifts=(displacement, displacement), dims=(1, 2)) for NHWC x."""
    assert x.ndim == 4, "expected (B, H, W, C)"
    B, H, W, C = x.shape
    dh = displacement % H
    dw = displacement % W

    def kernel(x_ref, o_ref):
        v = x_ref[...]                               # (1, H, W, C) block in VMEM
        v = _static_roll(v, dh, axis=1, size=H)      # H roll: untiled/major dim
        v = _static_roll(v, dw, axis=2, size=W)      # W roll: sublane dim
        o_ref[...] = v

    return pl.pallas_call(
        kernel,
        out_shape=jax.ShapeDtypeStruct((B, H, W, C), x.dtype),
        grid_spec=pltpu.PrefetchScalarGridSpec(
            num_scalar_prefetch=0,
            grid=(B,),
            in_specs=[pl.BlockSpec((1, H, W, C), lambda b: (b, 0, 0, 0))],
            out_specs=pl.BlockSpec((1, H, W, C), lambda b: (b, 0, 0, 0)),
        ),
        compiler_params=pltpu.CompilerParams(
            dimension_semantics=("parallel",),
        ),
    )(x)


class CyclicShift:
    """Drop-in analogue of the PyTorch nn.Module."""

    def __init__(self, displacement):
        self.displacement = displacement

    def __call__(self, x):
        return cyclic_shift(x, self.displacement)


if __name__ == "__main__":
    key = jax.random.PRNGKey(0)

    # Small Swin-like NHWC feature map: batch=2, 24x24 spatial, 128 channels
    # (C multiple of 128 keeps the lane axis dense, per the perf feedback).
    B, H, W, C = 2, 24, 24, 128
    displacement = -8            # Swin-style shift = -window_size // 2

    x = jax.random.normal(key, (B, H, W, C), dtype=jnp.float32)

    shift = CyclicShift(displacement)
    out = jax.block_until_ready(shift(x))

    ref = jnp.roll(x, (displacement, displacement), axis=(1, 2))
    assert out.shape == x.shape
    assert jnp.array_equal(out, ref), "cyclic shift mismatch vs jnp.roll reference"

    # Reverse shift (as Swin does to undo the cyclic shift) must round-trip exactly.
    back = jax.block_until_ready(cyclic_shift(out, -displacement))
    assert jnp.array_equal(back, x), "reverse cyclic shift did not round-trip"

    print("KERNEL_OK")
</pallas_src>

<mosaic_0001>
module attributes {stable_mosaic.version = 11 : i64} {
  func.func @kernel(%arg0: i32, %arg1: memref<1x24x24x128xf32, #tpu.memory_space<vmem>>, %arg2: memref<1x24x24x128xf32, #tpu.memory_space<vmem>>) attributes {dimension_semantics = [#tpu.dimension_semantics<parallel>], iteration_bounds = array<i64: 2>, scalar_prefetch = 0 : i64, scratch_operands = 0 : i64, tpu.core_type = #tpu.core_type<tc>, window_params = [{transform_indices = @transform_0, window_bounds = array<i64: 1, 24, 24, 128>}, {transform_indices = @transform_1, window_bounds = array<i64: 1, 24, 24, 128>}]} {
    %c0 = arith.constant 0 : index
    %c0_0 = arith.constant 0 : index
    %c0_1 = arith.constant 0 : index
    %c0_2 = arith.constant 0 : index
    %0 = vector.load %arg1[%c0, %c0_0, %c0_1, %c0_2] : memref<1x24x24x128xf32, #tpu.memory_space<vmem>>, vector<1x24x24x128xf32>
    %1 = vector.extract_strided_slice %0 {offsets = [0, 8, 0, 0], sizes = [1, 16, 24, 128], strides = [1, 1, 1, 1]} : vector<1x24x24x128xf32> to vector<1x16x24x128xf32>
    %2 = vector.extract_strided_slice %0 {offsets = [0, 0, 0, 0], sizes = [1, 8, 24, 128], strides = [1, 1, 1, 1]} : vector<1x24x24x128xf32> to vector<1x8x24x128xf32>
    %3 = tpu.concatenate %1, %2 in 1 : vector<1x16x24x128xf32>, vector<1x8x24x128xf32> -> vector<1x24x24x128xf32>
    %4 = vector.extract_strided_slice %3 {offsets = [0, 0, 8, 0], sizes = [1, 24, 16, 128], strides = [1, 1, 1, 1]} : vector<1x24x24x128xf32> to vector<1x24x16x128xf32>
    %5 = vector.extract_strided_slice %3 {offsets = [0, 0, 0, 0], sizes = [1, 24, 8, 128], strides = [1, 1, 1, 1]} : vector<1x24x24x128xf32> to vector<1x24x8x128xf32>
    %6 = tpu.concatenate %4, %5 in 2 : vector<1x24x16x128xf32>, vector<1x24x8x128xf32> -> vector<1x24x24x128xf32>
    %c0_3 = arith.constant 0 : index
    %c0_4 = arith.constant 0 : index
    %c0_5 = arith.constant 0 : index
    %c0_6 = arith.constant 0 : index
    %7 = vector.load %arg2[%c0_3, %c0_4, %c0_5, %c0_6] : memref<1x24x24x128xf32, #tpu.memory_space<vmem>>, vector<1x24x24x128xf32>
    tpu.vector_store %arg2[%c0_3, %c0_4, %c0_5, %c0_6], %6 {strides = array<i32>} : memref<1x24x24x128xf32, #tpu.memory_space<vmem>>, vector<1x24x24x128xf32>,
    return
  }
  func.func @transform_0(%arg0: i32) -> (i32, i32, i32, i32) {
    %c0_i32 = arith.constant 0 : i32
    %c0_i32_0 = arith.constant 0 : i32
    %c0_i32_1 = arith.constant 0 : i32
    %c0_i32_2 = arith.constant 0 : i32
    return %arg0, %c0_i32, %c0_i32_0, %c0_i32_1 : i32, i32, i32, i32
  }
  func.func @transform_1(%arg0: i32) -> (i32, i32, i32, i32) {
    %c0_i32 = arith.constant 0 : i32
    %c0_i32_0 = arith.constant 0 : i32
    %c0_i32_1 = arith.constant 0 : i32
    %c0_i32_2 = arith.constant 0 : i32
    return %arg0, %c0_i32, %c0_i32_0, %c0_i32_1 : i32, i32, i32, i32
  }
}

</mosaic_0001>

<llo_original>
// kernel: tpu_custom_call.1
$region0: #{tpu_custom_call.1}
  #allocation0 [shape = 'u32[]', space=smem, size = 0x4, offset = 0x4, fixed_abs, tag = 'smem constant byte address 0x4 - core index']
  #allocation1 [shape = 'u32[144,128]{1,0:T(1,128)}', space=vmem, size = 0x12000, scoped, tag = 'internal scratch']
  %s0 = inlined_call_operand.hbm [shape: f32[2,24,24,128], index: 0, kind: input, shape index: {}]
  %s1 = inlined_call_operand.hbm [shape: f32[2,24,24,128], index: 1, kind: output, shape index: {}]
  %s2 = sld [smem:[#allocation0]]
  $region41: #{tpu_custom_call.1} parent=0
    _
  %s4 = ssub.s32 1, %s2
  %s5 = scalar_select 0, %s4, %s2
  $region1: #{tpu_custom_call.1} parent=0
    #allocation2 [shape = 'u8[589824]{0}', space=vmem, size = 0x90000, scoped, tag = 'input window, operand 0']
    #allocation3 [shape = 's32[2]{0}', space=sflag, size = 0x8, scoped, tag = 'scoped memory for tpu_custom_call.1']
    #allocation4 [shape = 's32[2]{0}', space=sflag, size = 0x8, scoped, tag = 'scoped memory for tpu_custom_call.1']
    #allocation5 [shape = 'u8[589824]{0}', space=vmem, size = 0x90000, scoped, tag = 'output window, operand 0']
    %6 = vsyncpa [#allocation3], 0
    %s7 = scalar_lea.sflag [#allocation3], 1
    %8 = vsyncpa %s7, 0
    %9 = vsyncpa [#allocation4], 0
    %s10 = scalar_lea.sflag [#allocation4], 1
    %11 = vsyncpa %s10, 0
    loop: start=0, step=1, limit=4
    $region2: #{tpu_custom_call.1} parent=1 // loop_pre_header
      _
    $region3: #{tpu_custom_call.1} parent=1 // loop_header
      %s13 = sphi 0, %s17
      %p14 = scmp.ge.s32.totalorder %s13, 4
      %s23 = sphi 0, %s25
      %s26 = sphi 0, %s23
      %s27 = sphi 0, %s26
      %s43 = sphi 0, %s27
      %s49 = sphi 0, %s51
      %s52 = sphi 0, %s49
      %s53 = sphi 0, %s52
      %s69 = sphi 0, %s53
    $region4: #{tpu_custom_call.1} parent=1 // loop_header_branch
      %16 = sbr.rel (%p14) target = $region8
    $region5: #{tpu_custom_call.1} parent=1 // loop_body
      %s18 = ssub.s32 %s13, 1
      %s19 = ssub.s32 %s13, 2
      %s20 = sadd.s32 %s13, 1
      %s21 = ssub.s32 %s13, %s20
      %p22 = scmp.eq.s32.totalorder %s21, 0
      %s24 = sadd.s32 %s23, 1
      %s25 = scalar_select %p22, %s23, %s24
      %p28 = pneg %p22
      %p29 = scmp.eq.s32.totalorder %s13, 1
      %p30 = por %p28, %p29
      %p31 = scmp.ne.s32.totalorder %s23, %s26
      %p32 = scmp.eq.s32.totalorder %s13, 0
      %p33 = por %p31, %p32
      %p34 = scmp.ne.s32.totalorder %s23, %s26
      %p35 = scmp.eq.s32.totalorder %s18, 1
      %p36 = por %p34, %p35
      %p37 = scmp.ne.s32.totalorder %s26, %s27
      %p38 = scmp.eq.s32.totalorder %s18, 0
      %p39 = por %p37, %p38
      %p40 = scmp.ne.s32.totalorder %s26, %s27
      %p41 = scmp.eq.s32.totalorder %s19, 1
      %p42 = por %p40, %p41
      %p44 = scmp.ne.s32.totalorder %s27, %s43
      %p45 = scmp.eq.s32.totalorder %s19, 0
      %p46 = por %p44, %p45
      %s47 = ssub.s32 %s13, %s20
      %p48 = scmp.eq.s32.totalorder %s47, 0
      %s50 = sadd.s32 %s49, 1
      %s51 = scalar_select %p48, %s49, %s50
      %p54 = pneg %p48
      %p55 = scmp.eq.s32.totalorder %s13, 1
      %p56 = por %p54, %p55
      %p57 = scmp.ne.s32.totalorder %s49, %s52
      %p58 = scmp.eq.s32.totalorder %s13, 0
      %p59 = por %p57, %p58
      %p60 = scmp.ne.s32.totalorder %s49, %s52
      %p61 = scmp.eq.s32.totalorder %s18, 1
      %p62 = por %p60, %p61
      %p63 = scmp.ne.s32.totalorder %s52, %s53
      %p64 = scmp.eq.s32.totalorder %s18, 0
      %p65 = por %p63, %p64
      %p66 = scmp.ne.s32.totalorder %s52, %s53
      %p67 = scmp.eq.s32.totalorder %s19, 1
      %p68 = por %p66, %p67
      %p70 = scmp.ne.s32.totalorder %s53, %s69
      %p71 = scmp.eq.s32.totalorder %s19, 0
      %p72 = por %p70, %p71
      %p73 = scmp.le.s32.totalorder 1, %s13
      %p74 = scmp.lt.s32.totalorder %s13, 3
      %p75 = pnand %p73, %p74
      %p76 = pneg %p75
      // Predicated region
      $region9: #{tpu_custom_call.1} parent=5 // pred_check
        _
      $region10: #{tpu_custom_call.1} parent=5 // pred_check_branch
        %78 = sbr.rel (%p75) target = $region12
      $region11: #{tpu_custom_call.1} parent=5 // pred_region
        %s79 = ssub.s32 %s13, 1
      $region12: #{tpu_custom_call.1} parent=5 // pred_fallthru
        _
      %p80 = scmp.lt.s32.totalorder %s13, 2
      // Predicated region
      $region13: #{tpu_custom_call.1} parent=5 // pred_check
        %p81 = pneg %p80
      $region14: #{tpu_custom_call.1} parent=5 // pred_check_branch
        %83 = sbr.rel (%p81) target = $region16
      $region15: #{tpu_custom_call.1} parent=5 // pred_region
        // Predicated region
        $region17: #{tpu_custom_call.1} parent=15 // pred_check
          %p84 = pneg %p33
        $region18: #{tpu_custom_call.1} parent=15 // pred_check_branch
          %86 = sbr.rel (%p84) target = $region20
        $region19: #{tpu_custom_call.1} parent=15 // pred_region
          %s87 = sand.u32 %s23, 1
          %s88 = scalar_lea.sflag [#allocation3], %s87
          %s89 = sand.u32 %s23, 1
          %s90 = smul.addr %s89, 576
          %s91 = scalar_lea.vmem [#allocation2], %s90
          %s93 = ssub.s32 9216, 9216
          %94 = vsyncadd %s88, %s93
          %s95 = smul.addr %s13, 72
          %s96 = smul.addr %s95, 128
          %s97 = scalar_lea.hbm %s0, %s96
          %s98 = sshll.u32 %s91, 4
          %s99 = int_to_ptr.vmem [resolvable:$true] %s98
          %104 = dma.hbm_to_vmem [thread:$0]  %s97, 9216, %s99, %s88, 128, 128, 8
        $region20: #{tpu_custom_call.1} parent=15 // pred_fallthru
          _
      $region16: #{tpu_custom_call.1} parent=5 // pred_fallthru
        _
      %p105 = scmp.le.s32.totalorder 1, %s13
      %p106 = scmp.lt.s32.totalorder %s13, 3
      %p107 = pnand %p105, %p106
      %p108 = pneg %p107
      // Predicated region
      $region21: #{tpu_custom_call.1} parent=5 // pred_check
        _
      $region22: #{tpu_custom_call.1} parent=5 // pred_check_branch
        %110 = sbr.rel (%p107) target = $region24
      $region23: #{tpu_custom_call.1} parent=5 // pred_region
        %s111 = ssub.s32 %s13, 1
        %s112 = sand.u32 %s26, 1
        %s113 = scalar_lea.sflag [#allocation3], %s112
        %s114 = sand.u32 %s26, 1
        %s115 = smul.addr %s114, 576
        %s116 = scalar_lea.vmem [#allocation2], %s115
        // Predicated region
        $region25: #{tpu_custom_call.1} parent=23 // pred_check
          %p117 = pneg %p39
        $region26: #{tpu_custom_call.1} parent=23 // pred_check_branch
          %119 = sbr.rel (%p117) target = $region28
        $region27: #{tpu_custom_call.1} parent=23 // pred_region
          %120 = dma.done %s113, 9216
        $region28: #{tpu_custom_call.1} parent=23 // pred_fallthru
          _
        %s121 = sand.u32 %s26, 1
        %s122 = scalar_lea.sflag [#allocation3], %s121
        %s123 = sand.u32 %s26, 1
        %s124 = smul.addr %s123, 576
        %s125 = scalar_lea.vmem [#allocation2], %s124
        %p126 = pneg %p39
        %p127 = pneg %p36
        %p128 = pneg %p65
        %p129 = pneg %p62
        %s130 = sand.u32 %s52, 1
        %s131 = scalar_lea.sflag [#allocation4], %s130
        %s132 = sand.u32 %s52, 1
        %s133 = smul.addr %s132, 576
        %s134 = scalar_lea.vmem [#allocation5], %s133
        %v135 = vld [vmem:[%s116] sm:$0xff]
        %v136 = vld [vmem:[%s116 + $0x8] sm:$0xff]
        %v137 = vld [vmem:[%s116 + $0x10] sm:$0xff]
        %v138 = vld [vmem:[%s116 + $0x18] sm:$0xff]
        %v139 = vld [vmem:[%s116 + $0x20] sm:$0xff]
        %v140 = vld [vmem:[%s116 + $0x28] sm:$0xff]
        %v141 = vld [vmem:[%s116 + $0x30] sm:$0xff]
        %v142 = vld [vmem:[%s116 + $0x38] sm:$0xff]
        %v143 = vld [vmem:[%s116 + $0x40] sm:$0xff]
        %v144 = vld [vmem:[%s116 + $0x48] sm:$0xff]
        %v145 = vld [vmem:[%s116 + $0x50] sm:$0xff]
        %v146 = vld [vmem:[%s116 + $0x58] sm:$0xff]
        %v147 = vld [vmem:[%s116 + $0x60] sm:$0xff]
        %v148 = vld [vmem:[%s116 + $0x68] sm:$0xff]
        %v149 = vld [vmem:[%s116 + $0x70] sm:$0xff]
        %v150 = vld [vmem:[%s116 + $0x78] sm:$0xff]
        %v151 = vld [vmem:[%s116 + $0x80] sm:$0xff]
        %v152 = vld [vmem:[%s116 + $0x88] sm:$0xff]
        %v153 = vld [vmem:[%s116 + $0x90] sm:$0xff]
        %v154 = vld [vmem:[%s116 + $0x98] sm:$0xff]
        %v155 = vld [vmem:[%s116 + $0xa0] sm:$0xff]
        %v156 = vld [vmem:[%s116 + $0xa8] sm:$0xff]
        %v157 = vld [vmem:[%s116 + $0xb0] sm:$0xff]
        %v158 = vld [vmem:[%s116 + $0xb8] sm:$0xff]
        %v159 = vld [vmem:[%s116 + $0xc0] sm:$0xff]
        %v160 = vld [vmem:[%s116 + $0xc8] sm:$0xff]
        %v161 = vld [vmem:[%s116 + $0xd0] sm:$0xff]
        %v162 = vld [vmem:[%s116 + $0xd8] sm:$0xff]
        %v163 = vld [vmem:[%s116 + $0xe0] sm:$0xff]
        %v164 = vld [vmem:[%s116 + $0xe8] sm:$0xff]
        %v165 = vld [vmem:[%s116 + $0xf0] sm:$0xff]
        %v166 = vld [vmem:[%s116 + $0xf8] sm:$0xff]
        %v167 = vld [vmem:[%s116 + $0x100] sm:$0xff]
        %v168 = vld [vmem:[%s116 + $0x108] sm:$0xff]
        %v169 = vld [vmem:[%s116 + $0x110] sm:$0xff]
        %v170 = vld [vmem:[%s116 + $0x118] sm:$0xff]
        %v171 = vld [vmem:[%s116 + $0x120] sm:$0xff]
        %v172 = vld [vmem:[%s116 + $0x128] sm:$0xff]
        %v173 = vld [vmem:[%s116 + $0x130] sm:$0xff]
        %v174 = vld [vmem:[%s116 + $0x138] sm:$0xff]
        %v175 = vld [vmem:[%s116 + $0x140] sm:$0xff]
        %v176 = vld [vmem:[%s116 + $0x148] sm:$0xff]
        %v177 = vld [vmem:[%s116 + $0x150] sm:$0xff]
        %v178 = vld [vmem:[%s116 + $0x158] sm:$0xff]
        %v179 = vld [vmem:[%s116 + $0x160] sm:$0xff]
        %v180 = vld [vmem:[%s116 + $0x168] sm:$0xff]
        %v181 = vld [vmem:[%s116 + $0x170] sm:$0xff]
        %v182 = vld [vmem:[%s116 + $0x178] sm:$0xff]
        %v183 = vld [vmem:[%s116 + $0x180] sm:$0xff]
        %v184 = vld [vmem:[%s116 + $0x188] sm:$0xff]
        %v185 = vld [vmem:[%s116 + $0x190] sm:$0xff]
        %v186 = vld [vmem:[%s116 + $0x198] sm:$0xff]
        %v187 = vld [vmem:[%s116 + $0x1a0] sm:$0xff]
        %v188 = vld [vmem:[%s116 + $0x1a8] sm:$0xff]
        %v189 = vld [vmem:[%s116 + $0x1b0] sm:$0xff]
        %v190 = vld [vmem:[%s116 + $0x1b8] sm:$0xff]
        %v191 = vld [vmem:[%s116 + $0x1c0] sm:$0xff]
        %v192 = vld [vmem:[%s116 + $0x1c8] sm:$0xff]
        %v193 = vld [vmem:[%s116 + $0x1d0] sm:$0xff]
        %v194 = vld [vmem:[%s116 + $0x1d8] sm:$0xff]
        %v195 = vld [vmem:[%s116 + $0x1e0] sm:$0xff]
        %v196 = vld [vmem:[%s116 + $0x1e8] sm:$0xff]
        %v197 = vld [vmem:[%s116 + $0x1f0] sm:$0xff]
        %v198 = vld [vmem:[%s116 + $0x1f8] sm:$0xff]
        %v199 = vld [vmem:[%s116 + $0x200] sm:$0xff]
        %v200 = vld [vmem:[%s116 + $0x208] sm:$0xff]
        %v201 = vld [vmem:[%s116 + $0x210] sm:$0xff]
        %v202 = vld [vmem:[%s116 + $0x218] sm:$0xff]
        %v203 = vld [vmem:[%s116 + $0x220] sm:$0xff]
        %v204 = vld [vmem:[%s116 + $0x228] sm:$0xff]
        %v205 = vld [vmem:[%s116 + $0x230] sm:$0xff]
        %v206 = vld [vmem:[%s116 + $0x238] sm:$0xff]
        %207 = vst [vmem:[%s134] sm:$0xff] %v160
        %208 = vst [vmem:[%s134 + $0x8] sm:$0xff] %v161
        %209 = vst [vmem:[%s134 + $0x10] sm:$0xff] %v159
        %210 = vst [vmem:[%s134 + $0x18] sm:$0xff] %v163
        %211 = vst [vmem:[%s134 + $0x20] sm:$0xff] %v164
        %212 = vst [vmem:[%s134 + $0x28] sm:$0xff] %v162
        %213 = vst [vmem:[%s134 + $0x30] sm:$0xff] %v166
        %214 = vst [vmem:[%s134 + $0x38] sm:$0xff] %v167
        %215 = vst [vmem:[%s134 + $0x40] sm:$0xff] %v165
        %216 = vst [vmem:[%s134 + $0x48] sm:$0xff] %v169
        %217 = vst [vmem:[%s134 + $0x50] sm:$0xff] %v170
        %218 = vst [vmem:[%s134 + $0x58] sm:$0xff] %v168
        %219 = vst [vmem:[%s134 + $0x60] sm:$0xff] %v172
        %220 = vst [vmem:[%s134 + $0x68] sm:$0xff] %v173
        %221 = vst [vmem:[%s134 + $0x70] sm:$0xff] %v171
        %222 = vst [vmem:[%s134 + $0x78] sm:$0xff] %v175
        %223 = vst [vmem:[%s134 + $0x80] sm:$0xff] %v176
        %224 = vst [vmem:[%s134 + $0x88] sm:$0xff] %v174
        %225 = vst [vmem:[%s134 + $0x90] sm:$0xff] %v178
        %226 = vst [vmem:[%s134 + $0x98] sm:$0xff] %v179
        %227 = vst [vmem:[%s134 + $0xa0] sm:$0xff] %v177
        %228 = vst [vmem:[%s134 + $0xa8] sm:$0xff] %v181
        %229 = vst [vmem:[%s134 + $0xb0] sm:$0xff] %v182
        %230 = vst [vmem:[%s134 + $0xb8] sm:$0xff] %v180
        %231 = vst [vmem:[%s134 + $0xc0] sm:$0xff] %v184
        %232 = vst [vmem:[%s134 + $0xc8] sm:$0xff] %v185
        %233 = vst [vmem:[%s134 + $0xd0] sm:$0xff] %v183
        %234 = vst [vmem:[%s134 + $0xd8] sm:$0xff] %v187
        %235 = vst [vmem:[%s134 + $0xe0] sm:$0xff] %v188
        %236 = vst [vmem:[%s134 + $0xe8] sm:$0xff] %v186
        %237 = vst [vmem:[%s134 + $0xf0] sm:$0xff] %v190
        %238 = vst [vmem:[%s134 + $0xf8] sm:$0xff] %v191
        %239 = vst [vmem:[%s134 + $0x100] sm:$0xff] %v189
        %240 = vst [vmem:[%s134 + $0x108] sm:$0xff] %v193
        %241 = vst [vmem:[%s134 + $0x110] sm:$0xff] %v194
        %242 = vst [vmem:[%s134 + $0x118] sm:$0xff] %v192
        %243 = vst [vmem:[%s134 + $0x120] sm:$0xff] %v196
        %244 = vst [vmem:[%s134 + $0x128] sm:$0xff] %v197
        %245 = vst [vmem:[%s134 + $0x130] sm:$0xff] %v195
        %246 = vst [vmem:[%s134 + $0x138] sm:$0xff] %v199
        %247 = vst [vmem:[%s134 + $0x140] sm:$0xff] %v200
        %248 = vst [vmem:[%s134 + $0x148] sm:$0xff] %v198
        %249 = vst [vmem:[%s134 + $0x150] sm:$0xff] %v202
        %250 = vst [vmem:[%s134 + $0x158] sm:$0xff] %v203
        %251 = vst [vmem:[%s134 + $0x160] sm:$0xff] %v201
        %252 = vst [vmem:[%s134 + $0x168] sm:$0xff] %v205
        %253 = vst [vmem:[%s134 + $0x170] sm:$0xff] %v206
        %254 = vst [vmem:[%s134 + $0x178] sm:$0xff] %v204
        %255 = vst [vmem:[%s134 + $0x180] sm:$0xff] %v136
        %256 = vst [vmem:[%s134 + $0x188] sm:$0xff] %v137
        %257 = vst [vmem:[%s134 + $0x190] sm:$0xff] %v135
        %258 = vst [vmem:[%s134 + $0x198] sm:$0xff] %v139
        %259 = vst [vmem:[%s134 + $0x1a0] sm:$0xff] %v140
        %260 = vst [vmem:[%s134 + $0x1a8] sm:$0xff] %v138
        %261 = vst [vmem:[%s134 + $0x1b0] sm:$0xff] %v142
        %262 = vst [vmem:[%s134 + $0x1b8] sm:$0xff] %v143
        %263 = vst [vmem:[%s134 + $0x1c0] sm:$0xff] %v141
        %264 = vst [vmem:[%s134 + $0x1c8] sm:$0xff] %v145
        %265 = vst [vmem:[%s134 + $0x1d0] sm:$0xff] %v146
        %266 = vst [vmem:[%s134 + $0x1d8] sm:$0xff] %v144
        %267 = vst [vmem:[%s134 + $0x1e0] sm:$0xff] %v148
        %268 = vst [vmem:[%s134 + $0x1e8] sm:$0xff] %v149
        %269 = vst [vmem:[%s134 + $0x1f0] sm:$0xff] %v147
        %270 = vst [vmem:[%s134 + $0x1f8] sm:$0xff] %v151
        %271 = vst [vmem:[%s134 + $0x200] sm:$0xff] %v152
        %272 = vst [vmem:[%s134 + $0x208] sm:$0xff] %v150
        %273 = vst [vmem:[%s134 + $0x210] sm:$0xff] %v154
        %274 = vst [vmem:[%s134 + $0x218] sm:$0xff] %v155
        %275 = vst [vmem:[%s134 + $0x220] sm:$0xff] %v153
        %276 = vst [vmem:[%s134 + $0x228] sm:$0xff] %v157
        %277 = vst [vmem:[%s134 + $0x230] sm:$0xff] %v158
        %278 = vst [vmem:[%s134 + $0x238] sm:$0xff] %v156
        %s279 = sand.u32 %s52, 1
        %s280 = scalar_lea.sflag [#allocation4], %s279
        %s281 = sand.u32 %s52, 1
        %s282 = smul.addr %s281, 576
        %s283 = scalar_lea.vmem [#allocation5], %s282
        // Predicated region
        $region29: #{tpu_custom_call.1} parent=23 // pred_check
          %p284 = pneg %p62
        $region30: #{tpu_custom_call.1} parent=23 // pred_check_branch
          %286 = sbr.rel (%p284) target = $region32
        $region31: #{tpu_custom_call.1} parent=23 // pred_region
          %s288 = ssub.s32 9216, 9216
          %289 = vsyncadd %s280, %s288
          %s290 = smul.addr %s18, 72
          %s291 = smul.addr %s290, 128
          %s292 = scalar_lea.hbm %s1, %s291
          %s293 = sshll.u32 %s283, 4
          %s294 = int_to_ptr.vmem [resolvable:$true] %s293
          %299 = dma.vmem_to_hbm [thread:$0]  %s294, 9216, %s292, %s280, 128, 128, 8
        $region32: #{tpu_custom_call.1} parent=23 // pred_fallthru
          _
      $region24: #{tpu_custom_call.1} parent=5 // pred_fallthru
        _
      %p300 = scmp.le.s32.totalorder 2, %s13
      // Predicated region
      $region33: #{tpu_custom_call.1} parent=5 // pred_check
        %p301 = pneg %p300
      $region34: #{tpu_custom_call.1} parent=5 // pred_check_branch
        %303 = sbr.rel (%p301) target = $region36
      $region35: #{tpu_custom_call.1} parent=5 // pred_region
        %s304 = ssub.s32 %s13, 2
        // Predicated region
        $region37: #{tpu_custom_call.1} parent=35 // pred_check
          %p305 = pneg %p68
        $region38: #{tpu_custom_call.1} parent=35 // pred_check_branch
          %307 = sbr.rel (%p305) target = $region40
        $region39: #{tpu_custom_call.1} parent=35 // pred_region
          %s308 = sand.u32 %s53, 1
          %s309 = scalar_lea.sflag [#allocation4], %s308
          %s310 = sand.u32 %s53, 1
          %s311 = smul.addr %s310, 576
          %s312 = scalar_lea.vmem [#allocation5], %s311
          %313 = dma.done %s309, 9216
        $region40: #{tpu_custom_call.1} parent=35 // pred_fallthru
          _
      $region36: #{tpu_custom_call.1} parent=5 // pred_fallthru
        _
    $region6: #{tpu_custom_call.1} parent=1 // loop_footer
      %s17 = sadd.s32 1, %s13
    $region7: #{tpu_custom_call.1} parent=1 // loop_footer_branch
      %12 = sbr.rel target = $region3
    $region8: #{tpu_custom_call.1} parent=1 // loop_exit
      _
    %314 = vsyncpa [#allocation3], 1
    %s315 = scalar_lea.sflag [#allocation3], 1
    %316 = vsyncpa %s315, 1
    %317 = vsyncpa [#allocation4], 1
    %s318 = scalar_lea.sflag [#allocation4], 1
    %319 = vsyncpa %s318, 1

</llo_original>
